<compile_context>
chip_gen: v6e
topology: v6e:2x2x1
jax: 0.10.0
libtpu: 0.0.40
codegen_flags: <defaults>
</compile_context>

<pallas_src>
import functools
import math

import jax
import jax.numpy as jnp
from jax.experimental import pallas as pl
from jax.experimental.pallas import tpu as pltpu


def _round_up(x, m):
    return ((x + m - 1) // m) * m


# ----------------------------- Pallas kernel ------------------------------- #
def _mech_comm_kernel(x_ref, wqkv_ref, bqkv_ref, red_ref, exp_ref, wf_ref, bf_ref,
                      o_ref, *, n_blocks, n_heads, head_dim):
    block_dim = n_heads * head_dim
    dim = n_blocks * block_dim

    # Fused q|k|v projection: one (tile_n, dim) @ (dim, 3*dim) MXU matmul.
    # The head_dim**-0.5 scale is folded into wq / bq on the host.
    x = x_ref[...]
    qkv = jnp.dot(x, wqkv_ref[...], preferred_element_type=jnp.float32)
    qkv = qkv + bqkv_ref[...]
    q = qkv[:, :dim]
    k = qkv[:, dim:2 * dim]
    v = qkv[:, 2 * dim:]

    red = red_ref[...]      # (dim, G): sums head_dim lanes per (block, head) group
    expand = exp_ref[...]   # (G, dim): broadcasts per-group scalars back to head_dim lanes

    def block_roll(a, s):
        # a[:, (b, h, d)] -> a[:, ((b + s) % n_blocks, h, d)]; lane-dense rotation.
        amt = s * block_dim
        if amt == 0:
            return a
        return jnp.concatenate([a[:, amt:], a[:, :amt]], axis=-1)

    # Lane-dense scores for every (block, head) group at once:
    # scores[s][:, g=(b,h)] = sum_d q[:, (b,h,d)] * k[:, ((b+s)%nb, h, d)]
    scores, v_rolled = [], []
    for s in range(n_blocks):
        k_s = block_roll(k, s)
        v_rolled.append(block_roll(v, s))
        scores.append(jnp.dot(q * k_s, red, preferred_element_type=jnp.float32))

    # Per-(token, block, head) max over the n_blocks attended mechanisms.
    m = scores[0]
    for s in range(1, n_blocks):
        m = jnp.maximum(m, scores[s])

    # Unnormalized softmax-weighted combine; numerator/denominator stay in the
    # lane-dense (tile_n, dim) layout so the divide + final matmul stay fused.
    num = None
    den = None
    for s in range(n_blocks):
        e_exp = jnp.dot(jnp.exp(scores[s] - m), expand,
                        preferred_element_type=jnp.float32)        # (tile_n, dim)
        contrib = e_exp * v_rolled[s]
        num = contrib if num is None else num + contrib
        den = e_exp if den is None else den + e_exp

    attn = num * pl.reciprocal(den, approx=True)                   # (tile_n, dim), [b,h,d] order

    # Fused output projection (block-diagonal wf) + single lane-dense store.
    out = jnp.dot(attn.astype(wf_ref.dtype), wf_ref[...],
                  preferred_element_type=jnp.float32) + bf_ref[...]
    o_ref[...] = out.astype(o_ref.dtype)


# ------------------------------ host wrapper -------------------------------- #
def _vmem_bytes_estimate(tile_n, dim, n_blocks, n_heads, const_bytes,
                         in_itemsize, out_itemsize):
    g = n_blocks * n_heads
    io = 2 * tile_n * dim * (in_itemsize + out_itemsize)           # double-buffered x/out tiles
    f32 = 4
    interm = tile_n * dim * f32 * (3 + 3 + 2 * n_blocks + 4)       # qkv, q/k/v, rolled k/v, e_exp/num/den/attn
    interm += tile_n * g * f32 * (n_blocks + 2)                    # scores / max / exp
    return 2 * const_bytes + io + interm


def mechanism_communication(x, packed, n_blocks, n_heads, *, tile_n=512,
                            vmem_budget_bytes=48 * 1024 * 1024):
    """x: (bsz, seq, dim); packed: output of pack_params()."""
    w_qkv, b_qkv, red, expand, wf, bf = packed
    bsz, seq_len, dim = x.shape
    block_dim = dim // n_blocks
    head_dim = block_dim // n_heads
    N = bsz * seq_len
    out_dtype = x.dtype
    compute_dtype = w_qkv.dtype

    const_bytes = sum(int(a.size) * a.dtype.itemsize
                      for a in (w_qkv, b_qkv, red, expand, wf, bf))
    in_itemsize = jnp.dtype(compute_dtype).itemsize
    out_itemsize = jnp.dtype(out_dtype).itemsize

    # Large token tile (default 512, a multiple of 256 to fill the v6e/v7x MXU M
    # dim; multiple of 128 suffices on v5e), clamped to the problem size and
    # shrunk if the explicit VMEM budget (v7x has only 64 MiB) is exceeded.
    tile_n = max(8, min(_round_up(int(tile_n), 8), _round_up(N, 8)))
    while tile_n > 8 and _vmem_bytes_estimate(
            tile_n, dim, n_blocks, n_heads, const_bytes,
            in_itemsize, out_itemsize) > vmem_budget_bytes:
        tile_n = max(8, _round_up(tile_n // 2, 8))

    padded_n = _round_up(N, tile_n)
    x2 = x.reshape(N, dim).astype(compute_dtype)
    if padded_n != N:
        x2 = jnp.pad(x2, ((0, padded_n - N), (0, 0)))

    kernel = functools.partial(_mech_comm_kernel, n_blocks=n_blocks,
                               n_heads=n_heads, head_dim=head_dim)

    def full(arr):
        nd = arr.ndim
        return pl.BlockSpec(tuple(arr.shape), lambda i, _nd=nd: (0,) * _nd)

    out2d = pl.pallas_call(
        kernel,
        out_shape=jax.ShapeDtypeStruct((padded_n, dim), out_dtype),
        grid=(padded_n // tile_n,),
        in_specs=[pl.BlockSpec((tile_n, dim), lambda i: (i, 0)),
                  full(w_qkv), full(b_qkv), full(red), full(expand),
                  full(wf), full(bf)],
        out_specs=pl.BlockSpec((tile_n, dim), lambda i: (i, 0)),
        compiler_params=pltpu.CompilerParams(
            # Token axis is embarrassingly parallel -> sharded across v7x's 2 TCs.
            dimension_semantics=("parallel",),
            vmem_limit_bytes=int(vmem_budget_bytes)),
    )(x2, w_qkv, b_qkv, red, expand, wf, bf)

    return out2d[:N].reshape(bsz, seq_len, dim)


# --------------------------- parameter construction ------------------------- #
def group_linear_init(key, din, dout, n_blocks):
    """Matches GroupLinear: weight (nb, din_b, dout_b), bias (nb, dout_b), U(-a, a)."""
    din_b, dout_b = din // n_blocks, dout // n_blocks
    a = 1.0 / math.sqrt(dout_b)
    k1, k2 = jax.random.split(key)
    w = jax.random.uniform(k1, (n_blocks, din_b, dout_b), jnp.float32, -a, a)
    b = jax.random.uniform(k2, (n_blocks, dout_b), jnp.float32, -a, a)
    return w, b


def block_diag(w):
    nb, din_b, dout_b = w.shape
    bd = jnp.zeros((nb * din_b, nb * dout_b), w.dtype)
    for i in range(nb):
        bd = bd.at[i * din_b:(i + 1) * din_b, i * dout_b:(i + 1) * dout_b].set(w[i])
    return bd


def pack_params(raw, n_blocks, n_heads, *, compute_dtype=jnp.float32):
    """raw = [(wq,bq),(wk,bk),(wv,bv),(wf,bf)] with grouped (nb, block_dim, block_dim) weights."""
    (wq, bq), (wk, bk), (wv, bv), (wf, bf) = raw
    block_dim = wq.shape[1]
    head_dim = block_dim // n_heads
    dim = n_blocks * block_dim
    scale = head_dim ** (-0.5)

    # Fused q|k|v block-diagonal weight; the q scale is folded in here (one-time
    # host cost) so the kernel does zero per-tile scaling work.
    # TODO(synk): for large dim, keep grouped (nb, block_dim, block_dim) weights
    # instead of dense block-diag to avoid n_blocks x extra FLOPs / bandwidth.
    w_qkv = jnp.concatenate([block_diag(wq) * scale, block_diag(wk), block_diag(wv)],
                            axis=1).astype(compute_dtype)
    b_qkv = jnp.concatenate([bq.reshape(1, -1) * scale, bk.reshape(1, -1),
                             bv.reshape(1, -1)], axis=1).astype(jnp.float32)
    wf_bd = block_diag(wf).astype(compute_dtype)
    bf_r = bf.reshape(1, -1).astype(jnp.float32)

    # 0/1 segment matrices: feature lanes (in [block, head, head_dim] order) grouped
    # by (block, head).  `red` does the lane-segmented sum for the scores; its
    # transpose broadcasts per-group softmax weights back to head_dim lanes.
    groups = jnp.arange(dim) // head_dim                      # = b * n_heads + h
    red = (groups[:, None] == jnp.arange(n_blocks * n_heads)[None, :]).astype(jnp.float32)
    return w_qkv, b_qkv, red, red.T, wf_bd, bf_r


# ------------------------------ pure-JAX reference --------------------------- #
def reference_forward(x, raw_params, n_blocks, n_heads):
    bsz, seq, dim = x.shape
    block_dim = dim // n_blocks
    head_dim = block_dim // n_heads
    (wq, bq), (wk, bk), (wv, bv), (wf, bf) = raw_params

    def group_linear(z, w, b):
        zb = z.reshape(bsz, seq, n_blocks, block_dim)
        y = jnp.einsum('bsnd,nde->bsne', zb, w) + b
        return y.reshape(bsz, seq, dim)

    q = group_linear(x, wq, bq).reshape(bsz, seq, n_blocks, n_heads, head_dim)
    k = group_linear(x, wk, bk).reshape(bsz, seq, n_blocks, n_heads, head_dim)
    v = group_linear(x, wv, bv).reshape(bsz, seq, n_blocks, n_heads, head_dim)
    q = jnp.swapaxes(q, 2, 3) * (head_dim ** (-0.5))
    k = jnp.swapaxes(k, 2, 3)
    v = jnp.swapaxes(v, 2, 3)
    score = jnp.einsum('bshnd,bshmd->bshnm', q, k)
    score = jax.nn.softmax(score, axis=-1)
    out = jnp.einsum('bshnm,bshmd->bshnd', score, v)
    out = jnp.swapaxes(out, 2, 3).reshape(bsz, seq, dim)
    out = group_linear(out, wf, bf)
    return out


# ----------------------------------- main ------------------------------------ #
if __name__ == "__main__":
    bsz, seq_len, dim = 2, 8, 32
    n_blocks, n_heads = 4, 2            # block_dim=8, head_dim=4, emb_dim=dim

    key = jax.random.PRNGKey(0)
    kx, kq, kk, kv, kf = jax.random.split(key, 5)
    x = jax.random.normal(kx, (bsz, seq_len, dim), jnp.float32)

    raw = [group_linear_init(kq, dim, dim, n_blocks),
           group_linear_init(kk, dim, dim, n_blocks),
           group_linear_init(kv, dim, dim, n_blocks),
           group_linear_init(kf, dim, dim, n_blocks)]

    ref = reference_forward(x, raw, n_blocks, n_heads)

    # fp32 path (tolerance covers the approx softmax reciprocal on the EUP).
    packed_f32 = pack_params(raw, n_blocks, n_heads, compute_dtype=jnp.float32)
    out_f32 = jax.block_until_ready(
        mechanism_communication(x, packed_f32, n_blocks, n_heads, tile_n=512))
    assert out_f32.shape == (bsz, seq_len, dim)
    err32 = float(jnp.max(jnp.abs(out_f32 - ref)))
    assert jnp.allclose(out_f32, ref, atol=2e-3, rtol=2e-3), \
        f"fp32 max abs err = {err32}"

    # bf16 MXU feed (halved weight DMA / VMEM residency), looser tolerance.
    packed_bf16 = pack_params(raw, n_blocks, n_heads, compute_dtype=jnp.bfloat16)
    out_bf16 = jax.block_until_ready(
        mechanism_communication(x.astype(jnp.bfloat16), packed_bf16,
                                n_blocks, n_heads, tile_n=512))
    err16 = float(jnp.max(jnp.abs(out_bf16.astype(jnp.float32) - ref)))
    assert jnp.allclose(out_bf16.astype(jnp.float32), ref, atol=6e-2, rtol=6e-2), \
        f"bf16 max abs err = {err16}"

    print("KERNEL_OK")
</pallas_src>

<mosaic_0001>
module attributes {stable_mosaic.version = 11 : i64} {
  func.func @_mech_comm_kernel(%arg0: i32, %arg1: memref<16x32xf32, #tpu.memory_space<vmem>>, %arg2: memref<32x96xf32, #tpu.memory_space<vmem>>, %arg3: memref<1x96xf32, #tpu.memory_space<vmem>>, %arg4: memref<32x8xf32, #tpu.memory_space<vmem>>, %arg5: memref<8x32xf32, #tpu.memory_space<vmem>>, %arg6: memref<32x32xf32, #tpu.memory_space<vmem>>, %arg7: memref<1x32xf32, #tpu.memory_space<vmem>>, %arg8: memref<16x32xf32, #tpu.memory_space<vmem>>) attributes {dimension_semantics = [#tpu.dimension_semantics<parallel>], iteration_bounds = array<i64: 1>, scalar_prefetch = 0 : i64, scratch_operands = 0 : i64, tpu.core_type = #tpu.core_type<tc>, window_params = [{transform_indices = @transform_0, window_bounds = array<i64: 16, 32>}, {pipeline_mode = #tpu.pipeline_mode<synchronous>, transform_indices = @transform_1, window_bounds = array<i64: 32, 96>}, {pipeline_mode = #tpu.pipeline_mode<synchronous>, transform_indices = @transform_2, window_bounds = array<i64: 1, 96>}, {pipeline_mode = #tpu.pipeline_mode<synchronous>, transform_indices = @transform_3, window_bounds = array<i64: 32, 8>}, {pipeline_mode = #tpu.pipeline_mode<synchronous>, transform_indices = @transform_4, window_bounds = array<i64: 8, 32>}, {pipeline_mode = #tpu.pipeline_mode<synchronous>, transform_indices = @transform_5, window_bounds = array<i64: 32, 32>}, {pipeline_mode = #tpu.pipeline_mode<synchronous>, transform_indices = @transform_6, window_bounds = array<i64: 1, 32>}, {transform_indices = @transform_7, window_bounds = array<i64: 16, 32>}]} {
    %c0 = arith.constant 0 : index
    %c0_0 = arith.constant 0 : index
    %0 = vector.load %arg1[%c0, %c0_0] : memref<16x32xf32, #tpu.memory_space<vmem>>, vector<16x32xf32>
    %c0_1 = arith.constant 0 : index
    %c0_2 = arith.constant 0 : index
    %1 = vector.load %arg2[%c0_1, %c0_2] : memref<32x96xf32, #tpu.memory_space<vmem>>, vector<32x96xf32>
    %cst = arith.constant dense<0.000000e+00> : vector<16x96xf32>
    %2 = tpu.matmul %0, %1, %cst {dimension_numbers = #tpu.dot_dimension_numbers<[1], [0], [0], [1], [0, 0, 1, 1], [], []>} : vector<16x32xf32>, vector<32x96xf32>, vector<16x96xf32> -> vector<16x96xf32>
    %c0_3 = arith.constant 0 : index
    %c0_4 = arith.constant 0 : index
    %3 = vector.load %arg3[%c0_3, %c0_4] : memref<1x96xf32, #tpu.memory_space<vmem>>, vector<1x96xf32>
    %4 = vector.broadcast %3 : vector<1x96xf32> to vector<16x96xf32>
    %5 = arith.addf %2, %4 : vector<16x96xf32>
    %6 = vector.extract_strided_slice %5 {offsets = [0, 0], sizes = [16, 32], strides = [1, 1]} : vector<16x96xf32> to vector<16x32xf32>
    %7 = vector.extract_strided_slice %5 {offsets = [0, 32], sizes = [16, 32], strides = [1, 1]} : vector<16x96xf32> to vector<16x32xf32>
    %8 = vector.extract_strided_slice %5 {offsets = [0, 64], sizes = [16, 32], strides = [1, 1]} : vector<16x96xf32> to vector<16x32xf32>
    %c0_5 = arith.constant 0 : index
    %c0_6 = arith.constant 0 : index
    %9 = vector.load %arg4[%c0_5, %c0_6] : memref<32x8xf32, #tpu.memory_space<vmem>>, vector<32x8xf32>
    %c0_7 = arith.constant 0 : index
    %c0_8 = arith.constant 0 : index
    %10 = vector.load %arg5[%c0_7, %c0_8] : memref<8x32xf32, #tpu.memory_space<vmem>>, vector<8x32xf32>
    %11 = arith.mulf %6, %7 : vector<16x32xf32>
    %cst_9 = arith.constant dense<0.000000e+00> : vector<16x8xf32>
    %12 = tpu.matmul %11, %9, %cst_9 {dimension_numbers = #tpu.dot_dimension_numbers<[1], [0], [0], [1], [0, 0, 1, 1], [], []>} : vector<16x32xf32>, vector<32x8xf32>, vector<16x8xf32> -> vector<16x8xf32>
    %13 = vector.extract_strided_slice %7 {offsets = [0, 8], sizes = [16, 24], strides = [1, 1]} : vector<16x32xf32> to vector<16x24xf32>
    %14 = vector.extract_strided_slice %7 {offsets = [0, 0], sizes = [16, 8], strides = [1, 1]} : vector<16x32xf32> to vector<16x8xf32>
    %15 = tpu.concatenate %13, %14 in 1 : vector<16x24xf32>, vector<16x8xf32> -> vector<16x32xf32>
    %16 = vector.extract_strided_slice %8 {offsets = [0, 8], sizes = [16, 24], strides = [1, 1]} : vector<16x32xf32> to vector<16x24xf32>
    %17 = vector.extract_strided_slice %8 {offsets = [0, 0], sizes = [16, 8], strides = [1, 1]} : vector<16x32xf32> to vector<16x8xf32>
    %18 = tpu.concatenate %16, %17 in 1 : vector<16x24xf32>, vector<16x8xf32> -> vector<16x32xf32>
    %19 = arith.mulf %6, %15 : vector<16x32xf32>
    %cst_10 = arith.constant dense<0.000000e+00> : vector<16x8xf32>
    %20 = tpu.matmul %19, %9, %cst_10 {dimension_numbers = #tpu.dot_dimension_numbers<[1], [0], [0], [1], [0, 0, 1, 1], [], []>} : vector<16x32xf32>, vector<32x8xf32>, vector<16x8xf32> -> vector<16x8xf32>
    %21 = vector.extract_strided_slice %7 {offsets = [0, 16], sizes = [16, 16], strides = [1, 1]} : vector<16x32xf32> to vector<16x16xf32>
    %22 = vector.extract_strided_slice %7 {offsets = [0, 0], sizes = [16, 16], strides = [1, 1]} : vector<16x32xf32> to vector<16x16xf32>
    %23 = tpu.concatenate %21, %22 in 1 : vector<16x16xf32>, vector<16x16xf32> -> vector<16x32xf32>
    %24 = vector.extract_strided_slice %8 {offsets = [0, 16], sizes = [16, 16], strides = [1, 1]} : vector<16x32xf32> to vector<16x16xf32>
    %25 = vector.extract_strided_slice %8 {offsets = [0, 0], sizes = [16, 16], strides = [1, 1]} : vector<16x32xf32> to vector<16x16xf32>
    %26 = tpu.concatenate %24, %25 in 1 : vector<16x16xf32>, vector<16x16xf32> -> vector<16x32xf32>
    %27 = arith.mulf %6, %23 : vector<16x32xf32>
    %cst_11 = arith.constant dense<0.000000e+00> : vector<16x8xf32>
    %28 = tpu.matmul %27, %9, %cst_11 {dimension_numbers = #tpu.dot_dimension_numbers<[1], [0], [0], [1], [0, 0, 1, 1], [], []>} : vector<16x32xf32>, vector<32x8xf32>, vector<16x8xf32> -> vector<16x8xf32>
    %29 = vector.extract_strided_slice %7 {offsets = [0, 24], sizes = [16, 8], strides = [1, 1]} : vector<16x32xf32> to vector<16x8xf32>
    %30 = vector.extract_strided_slice %7 {offsets = [0, 0], sizes = [16, 24], strides = [1, 1]} : vector<16x32xf32> to vector<16x24xf32>
    %31 = tpu.concatenate %29, %30 in 1 : vector<16x8xf32>, vector<16x24xf32> -> vector<16x32xf32>
    %32 = vector.extract_strided_slice %8 {offsets = [0, 24], sizes = [16, 8], strides = [1, 1]} : vector<16x32xf32> to vector<16x8xf32>
    %33 = vector.extract_strided_slice %8 {offsets = [0, 0], sizes = [16, 24], strides = [1, 1]} : vector<16x32xf32> to vector<16x24xf32>
    %34 = tpu.concatenate %32, %33 in 1 : vector<16x8xf32>, vector<16x24xf32> -> vector<16x32xf32>
    %35 = arith.mulf %6, %31 : vector<16x32xf32>
    %cst_12 = arith.constant dense<0.000000e+00> : vector<16x8xf32>
    %36 = tpu.matmul %35, %9, %cst_12 {dimension_numbers = #tpu.dot_dimension_numbers<[1], [0], [0], [1], [0, 0, 1, 1], [], []>} : vector<16x32xf32>, vector<32x8xf32>, vector<16x8xf32> -> vector<16x8xf32>
    %37 = arith.maximumf %12, %20 : vector<16x8xf32>
    %38 = arith.maximumf %37, %28 : vector<16x8xf32>
    %39 = arith.maximumf %38, %36 : vector<16x8xf32>
    %40 = arith.subf %12, %39 : vector<16x8xf32>
    %41 = math.exp %40 : vector<16x8xf32>
    %cst_13 = arith.constant dense<0.000000e+00> : vector<16x32xf32>
    %42 = tpu.matmul %41, %10, %cst_13 {dimension_numbers = #tpu.dot_dimension_numbers<[1], [0], [0], [1], [0, 0, 1, 1], [], []>} : vector<16x8xf32>, vector<8x32xf32>, vector<16x32xf32> -> vector<16x32xf32>
    %43 = arith.mulf %42, %8 : vector<16x32xf32>
    %44 = arith.subf %20, %39 : vector<16x8xf32>
    %45 = math.exp %44 : vector<16x8xf32>
    %cst_14 = arith.constant dense<0.000000e+00> : vector<16x32xf32>
    %46 = tpu.matmul %45, %10, %cst_14 {dimension_numbers = #tpu.dot_dimension_numbers<[1], [0], [0], [1], [0, 0, 1, 1], [], []>} : vector<16x8xf32>, vector<8x32xf32>, vector<16x32xf32> -> vector<16x32xf32>
    %47 = arith.mulf %46, %18 : vector<16x32xf32>
    %48 = arith.addf %43, %47 : vector<16x32xf32>
    %49 = arith.addf %42, %46 : vector<16x32xf32>
    %50 = arith.subf %28, %39 : vector<16x8xf32>
    %51 = math.exp %50 : vector<16x8xf32>
    %cst_15 = arith.constant dense<0.000000e+00> : vector<16x32xf32>
    %52 = tpu.matmul %51, %10, %cst_15 {dimension_numbers = #tpu.dot_dimension_numbers<[1], [0], [0], [1], [0, 0, 1, 1], [], []>} : vector<16x8xf32>, vector<8x32xf32>, vector<16x32xf32> -> vector<16x32xf32>
    %53 = arith.mulf %52, %26 : vector<16x32xf32>
    %54 = arith.addf %48, %53 : vector<16x32xf32>
    %55 = arith.addf %49, %52 : vector<16x32xf32>
    %56 = arith.subf %36, %39 : vector<16x8xf32>
    %57 = math.exp %56 : vector<16x8xf32>
    %cst_16 = arith.constant dense<0.000000e+00> : vector<16x32xf32>
    %58 = tpu.matmul %57, %10, %cst_16 {dimension_numbers = #tpu.dot_dimension_numbers<[1], [0], [0], [1], [0, 0, 1, 1], [], []>} : vector<16x8xf32>, vector<8x32xf32>, vector<16x32xf32> -> vector<16x32xf32>
    %59 = arith.mulf %58, %34 : vector<16x32xf32>
    %60 = arith.addf %54, %59 : vector<16x32xf32>
    %61 = arith.addf %55, %58 : vector<16x32xf32>
    %62 = tpu.reciprocal %61 {approx = true} : vector<16x32xf32> -> vector<16x32xf32>
    %63 = arith.mulf %60, %62 : vector<16x32xf32>
    %c0_17 = arith.constant 0 : index
    %c0_18 = arith.constant 0 : index
    %64 = vector.load %arg6[%c0_17, %c0_18] : memref<32x32xf32, #tpu.memory_space<vmem>>, vector<32x32xf32>
    %cst_19 = arith.constant dense<0.000000e+00> : vector<16x32xf32>
    %65 = tpu.matmul %63, %64, %cst_19 {dimension_numbers = #tpu.dot_dimension_numbers<[1], [0], [0], [1], [0, 0, 1, 1], [], []>} : vector<16x32xf32>, vector<32x32xf32>, vector<16x32xf32> -> vector<16x32xf32>
    %c0_20 = arith.constant 0 : index
    %c0_21 = arith.constant 0 : index
    %66 = vector.load %arg7[%c0_20, %c0_21] : memref<1x32xf32, #tpu.memory_space<vmem>>, vector<1x32xf32>
    %67 = vector.broadcast %66 : vector<1x32xf32> to vector<16x32xf32>
    %68 = arith.addf %65, %67 : vector<16x32xf32>
    %c0_22 = arith.constant 0 : index
    %c0_23 = arith.constant 0 : index
    %69 = vector.load %arg8[%c0_22, %c0_23] : memref<16x32xf32, #tpu.memory_space<vmem>>, vector<16x32xf32>
    tpu.vector_store %arg8[%c0_22, %c0_23], %68 {strides = array<i32>} : memref<16x32xf32, #tpu.memory_space<vmem>>, vector<16x32xf32>,
    return
  }
  func.func @transform_0(%arg0: i32) -> (i32, i32) {
    %c0_i32 = arith.constant 0 : i32
    %c0_i32_0 = arith.constant 0 : i32
    return %arg0, %c0_i32 : i32, i32
  }
  func.func @transform_1(%arg0: i32) -> (i32, i32) {
    %c0_i32 = arith.constant 0 : i32
    %c0_i32_0 = arith.constant 0 : i32
    %c0_i32_1 = arith.constant 0 : i32
    return %c0_i32, %c0_i32_0 : i32, i32
  }
  func.func @transform_2(%arg0: i32) -> (i32, i32) {
    %c0_i32 = arith.constant 0 : i32
    %c0_i32_0 = arith.constant 0 : i32
    %c0_i32_1 = arith.constant 0 : i32
    return %c0_i32, %c0_i32_0 : i32, i32
  }
  func.func @transform_3(%arg0: i32) -> (i32, i32) {
    %c0_i32 = arith.constant 0 : i32
    %c0_i32_0 = arith.constant 0 : i32
    %c0_i32_1 = arith.constant 0 : i32
    return %c0_i32, %c0_i32_0 : i32, i32
  }
  func.func @transform_4(%arg0: i32) -> (i32, i32) {
    %c0_i32 = arith.constant 0 : i32
    %c0_i32_0 = arith.constant 0 : i32
    %c0_i32_1 = arith.constant 0 : i32
    return %c0_i32, %c0_i32_0 : i32, i32
  }
  func.func @transform_5(%arg0: i32) -> (i32, i32) {
    %c0_i32 = arith.constant 0 : i32
    %c0_i32_0 = arith.constant 0 : i32
    %c0_i32_1 = arith.constant 0 : i32
    return %c0_i32, %c0_i32_0 : i32, i32
  }
  func.func @transform_6(%arg0: i32) -> (i32, i32) {
    %c0_i32 = arith.constant 0 : i32
    %c0_i32_0 = arith.constant 0 : i32
    %c0_i32_1 = arith.constant 0 : i32
    return %c0_i32, %c0_i32_0 : i32, i32
  }
  func.func @transform_7(%arg0: i32) -> (i32, i32) {
    %c0_i32 = arith.constant 0 : i32
    %c0_i32_0 = arith.constant 0 : i32
    return %arg0, %c0_i32 : i32, i32
  }
}

</mosaic_0001>

<llo_original>
// kernel: tpu_custom_call.1
$region0: #{tpu_custom_call.1}
  #allocation0 [shape = 'u32[]', space=smem, size = 0x4, offset = 0x4, fixed_abs, tag = 'smem constant byte address 0x4 - core index']
  #allocation1 [shape = 'u32[144,128]{1,0:T(1,128)}', space=vmem, size = 0x12000, scoped, tag = 'internal scratch']
  %s0 = inlined_call_operand.hbm [shape: f32[16,32], index: 0, kind: input, shape index: {}]
  %s1 = inlined_call_operand.vmem [shape: f32[32,96], index: 1, kind: input, shape index: {}]
  %s2 = inlined_call_operand.vmem [shape: f32[1,96], index: 2, kind: input, shape index: {}]
  %s3 = inlined_call_operand.vmem [shape: f32[32,8], index: 3, kind: input, shape index: {}]
  %s4 = inlined_call_operand.vmem [shape: f32[8,32], index: 4, kind: input, shape index: {}]
  %s5 = inlined_call_operand.hbm [shape: f32[32,32], index: 5, kind: input, shape index: {}]
  %s6 = inlined_call_operand.vmem [shape: f32[1,32], index: 6, kind: input, shape index: {}]
  %s7 = inlined_call_operand.hbm [shape: f32[16,32], index: 7, kind: output, shape index: {}]
  %s8 = sld [smem:[#allocation0]]
  $region46: #{tpu_custom_call.1} parent=0
    _
  %s10 = ssub.s32 1, %s8
  %s11 = scalar_select 0, %s10, %s8
  $region1: #{tpu_custom_call.1} parent=0
    #allocation2 [shape = 'u8[8192]{0}', space=vmem, size = 0x2000, scoped, tag = 'input window, operand 0, single buffered']
    #allocation3 [shape = 's32[1]{0}', space=sflag, size = 0x4, scoped, tag = 'scoped memory for tpu_custom_call.1']
    #allocation4 [shape = 's32[1]{0}', space=sflag, size = 0x4, scoped, tag = 'scoped memory for tpu_custom_call.1']
    #allocation5 [shape = 'u8[16384]{0}', space=vmem, size = 0x4000, scoped, tag = 'input window, operand 5, single buffered']
    #allocation6 [shape = 's32[1]{0}', space=sflag, size = 0x4, scoped, tag = 'scoped memory for tpu_custom_call.1']
    #allocation7 [shape = 'u8[8192]{0}', space=vmem, size = 0x2000, scoped, tag = 'output window, operand 0, single buffered']
    %12 = vsyncpa [#allocation3], 0
    %13 = vsyncpa [#allocation6], 0
    %14 = vsyncpa [#allocation4], 0
    // Predicated region
    $region2: #{tpu_custom_call.1} parent=1 // pred_check
      _
    $region3: #{tpu_custom_call.1} parent=1 // pred_check_branch
      %16 = sbr.rel (0) target = $region5
    $region4: #{tpu_custom_call.1} parent=1 // pred_region
      %s18 = ssub.s32 256, 256
      %19 = vsyncadd [#allocation3], %s18
      %s20 = sshll.u32 [#allocation2], 4
      %s21 = int_to_ptr.vmem [resolvable:$true] %s20
      %26 = dma.hbm_to_vmem [thread:$0]  %s0, 256, %s21, [#allocation3], 128, 128, 8
    $region5: #{tpu_custom_call.1} parent=1 // pred_fallthru
      _
    // Predicated region
    $region6: #{tpu_custom_call.1} parent=1 // pred_check
      _
    $region7: #{tpu_custom_call.1} parent=1 // pred_check_branch
      %28 = sbr.rel (0) target = $region9
    $region8: #{tpu_custom_call.1} parent=1 // pred_region
      _
    $region9: #{tpu_custom_call.1} parent=1 // pred_fallthru
      _
    // Predicated region
    $region10: #{tpu_custom_call.1} parent=1 // pred_check
      _
    $region11: #{tpu_custom_call.1} parent=1 // pred_check_branch
      %30 = sbr.rel (0) target = $region13
    $region12: #{tpu_custom_call.1} parent=1 // pred_region
      _
    $region13: #{tpu_custom_call.1} parent=1 // pred_fallthru
      _
    // Predicated region
    $region14: #{tpu_custom_call.1} parent=1 // pred_check
      _
    $region15: #{tpu_custom_call.1} parent=1 // pred_check_branch
      %32 = sbr.rel (0) target = $region17
    $region16: #{tpu_custom_call.1} parent=1 // pred_region
      _
    $region17: #{tpu_custom_call.1} parent=1 // pred_fallthru
      _
    // Predicated region
    $region18: #{tpu_custom_call.1} parent=1 // pred_check
      _
    $region19: #{tpu_custom_call.1} parent=1 // pred_check_branch
      %34 = sbr.rel (0) target = $region21
    $region20: #{tpu_custom_call.1} parent=1 // pred_region
      _
    $region21: #{tpu_custom_call.1} parent=1 // pred_fallthru
      _
    // Predicated region
    $region22: #{tpu_custom_call.1} parent=1 // pred_check
      _
    $region23: #{tpu_custom_call.1} parent=1 // pred_check_branch
      %36 = sbr.rel (0) target = $region25
    $region24: #{tpu_custom_call.1} parent=1 // pred_region
      %s38 = ssub.s32 512, 512
      %39 = vsyncadd [#allocation6], %s38
      %s40 = sshll.u32 [#allocation5], 4
      %s41 = int_to_ptr.vmem [resolvable:$true] %s40
      %46 = dma.hbm_to_vmem [thread:$0]  %s5, 512, %s41, [#allocation6], 128, 128, 8
    $region25: #{tpu_custom_call.1} parent=1 // pred_fallthru
      _
    // Predicated region
    $region26: #{tpu_custom_call.1} parent=1 // pred_check
      _
    $region27: #{tpu_custom_call.1} parent=1 // pred_check_branch
      %48 = sbr.rel (0) target = $region29
    $region28: #{tpu_custom_call.1} parent=1 // pred_region
      _
    $region29: #{tpu_custom_call.1} parent=1 // pred_fallthru
      _
    // Predicated region
    $region30: #{tpu_custom_call.1} parent=1 // pred_check
      _
    $region31: #{tpu_custom_call.1} parent=1 // pred_check_branch
      %50 = sbr.rel (0) target = $region33
    $region32: #{tpu_custom_call.1} parent=1 // pred_region
      %51 = dma.done [#allocation3], 256
    $region33: #{tpu_custom_call.1} parent=1 // pred_fallthru
      _
    // Predicated region
    $region34: #{tpu_custom_call.1} parent=1 // pred_check
      _
    $region35: #{tpu_custom_call.1} parent=1 // pred_check_branch
      %53 = sbr.rel (0) target = $region37
    $region36: #{tpu_custom_call.1} parent=1 // pred_region
      %54 = dma.done [#allocation6], 512
    $region37: #{tpu_custom_call.1} parent=1 // pred_fallthru
      _
    %v55 = vld [vmem:[#allocation2] sm:$0xff]
    %v56 = vld [vmem:[#allocation2 + $0x8] sm:$0xff]
    %v57 = vld [vmem:[%s1] sm:$0xff]
    %v58 = vld [vmem:[%s1 + $0x8] sm:$0xff]
    %v59 = vld [vmem:[%s1 + $0x10] sm:$0xff]
    %v60 = vld [vmem:[%s1 + $0x18] sm:$0xff]
    %v61 = vld [vmem:[%s2] sm:$0x1]
    %v63 = vlaneseq
    %v64 = vshrl.u32 %v63, 7
    %v65 = vsub.s32 0, %v64
    %v66 = vrot.slane %v61, %v65
    %vm68 = vcmask 261120
    %v70 = vsel %vm68, %v55, 0
    %v73 = vsel %vm68, %v56, 0
    %75 = vmatprep.subr.mxu0 0.0
    %76 = vmatpush1.msra.mxu0 0.0
    %77 = vmatprep.subr.mxu0 0.0
    %78 = vmatpush1.msra.mxu0 0.0
    %79 = vmatprep.subr.mxu0 0.0
    %80 = vmatpush1.msra.mxu0 0.0
    %81 = vmatprep.subr.mxu0 0.0
    %82 = vmatpush1.msra.mxu0 0.0
    %83 = vmatprep.subr.mxu0 0.0
    %84 = vmatpush1.msra.mxu0 0.0
    %85 = vmatprep.subr.mxu0 0.0
    %86 = vmatpush1.msra.mxu0 0.0
    %87 = vmatprep.subr.mxu0 0.0
    %88 = vmatpush1.msra.mxu0 0.0
    %89 = vmatprep.subr.mxu0 0.0
    %90 = vmatpush1.msra.mxu0 0.0
    %91 = vmatprep.subr.mxu0 0.0
    %92 = vmatpush1.msra.mxu0 0.0
    %93 = vmatprep.subr.mxu0 0.0
    %94 = vmatpush1.msra.mxu0 0.0
    %95 = vmatprep.subr.mxu0 0.0
    %96 = vmatpush1.msra.mxu0 0.0
    %97 = vmatprep.subr.mxu0 0.0
    %98 = vmatpush1.msra.mxu0 0.0
    %99 = vmatprep.subr.mxu0 0.0
    %100 = vmatpush1.msra.mxu0 %v60
    %101 = vmatprep.subr.mxu0 0.0
    %102 = vmatpush1.msra.mxu0 %v59
    %103 = vmatprep.subr.mxu0 0.0
    %104 = vmatpush1.msra.mxu0 %v58
    %105 = vmatprep.subr.mxu0 0.0
    %106 = vmatpush1.msra.mxu0 %v57
    %107 = vmatprep.subr.mxu0 0.0
    %108 = vmatpush2.msra.mxu0 0.0
    %109 = vmatprep.subr.mxu0 0.0
    %110 = vmatpush2.msra.mxu0 0.0
    %111 = vmatprep.subr.mxu0 0.0
    %112 = vmatpush2.msra.mxu0 0.0
    %113 = vmatprep.subr.mxu0 0.0
    %114 = vmatpush2.msra.mxu0 0.0
    %115 = vmatprep.subr.mxu0 0.0
    %116 = vmatpush2.msra.mxu0 0.0
    %117 = vmatprep.subr.mxu0 0.0
    %118 = vmatpush2.msra.mxu0 0.0
    %119 = vmatprep.subr.mxu0 0.0
    %120 = vmatpush2.msra.mxu0 0.0
    %121 = vmatprep.subr.mxu0 0.0
    %122 = vmatpush2.msra.mxu0 0.0
    %123 = vmatprep.subr.mxu0 0.0
    %124 = vmatpush2.msra.mxu0 0.0
    %125 = vmatprep.subr.mxu0 0.0
    %126 = vmatpush2.msra.mxu0 0.0
    %127 = vmatprep.subr.mxu0 0.0
    %128 = vmatpush2.msra.mxu0 0.0
    %129 = vmatprep.subr.mxu0 0.0
    %130 = vmatpush2.msra.mxu0 0.0
    %131 = vmatprep.subr.mxu0 0.0
    %132 = vmatpush2.msra.mxu0 0.0
    %133 = vmatprep.subr.mxu0 0.0
    %134 = vmatpush2.msra.mxu0 0.0
    %135 = vmatprep.subr.mxu0 0.0
    %136 = vmatpush2.msra.mxu0 0.0
    %137 = vmatprep.subr.mxu0 0.0
    %138 = vmatpush2.msra.mxu0 0.0
    %139 = vmatprep.mubr.f32.mxu0 0.0
    %140 = vmatmul.mubr.f32.gmra.mxu0 %v70
    %v141 = vpop.f32.mrf.mxu0
    %v142 = vadd.f32 %v66, %v141
    %v143 = vpop.f32.mrf.mxu0
    %144 = vmatprep.mubr.f32.mxu0 0.0
    %145 = vmatmul.mubr.f32.gmra.mxu0 %v73
    %v146 = vpop.f32.mrf.mxu0
    %v147 = vadd.f32 %v66, %v146
    %v148 = vpop.f32.mrf.mxu0
    %149 = vdwg.mxu0
    %v150 = vld [vmem:[%s3] sm:$0xff]
    %v151 = vld [vmem:[%s3 + $0x8] sm:$0xff]
    %v152 = vld [vmem:[%s3 + $0x10] sm:$0xff]
    %v153 = vld [vmem:[%s3 + $0x18] sm:$0xff]
    %v154 = vld [vmem:[%s4] sm:$0xff]
    %157 = vrot.lane.b32.xlu0 %v142, 96
    %v158 = vpop.permute.xlu0 %157
    %159 = vrot.lane.b32.xlu0 %v147, 96
    %v160 = vpop.permute.xlu0 %159
    %v163 = vmul.f32 %v142, %v158
    %v164 = vmul.f32 %v147, %v160
    %v166 = vsel %vm68, %v163, 0
    %v169 = vsel %vm68, %v164, 0
    %171 = vmatprep.subr.mxu0 0.0
    %172 = vmatpush1.msra.mxu0 0.0
    %173 = vmatprep.subr.mxu0 0.0
    %174 = vmatpush1.msra.mxu0 0.0
    %175 = vmatprep.subr.mxu0 0.0
    %176 = vmatpush1.msra.mxu0 0.0
    %177 = vmatprep.subr.mxu0 0.0
    %178 = vmatpush1.msra.mxu0 0.0
    %179 = vmatprep.subr.mxu0 0.0
    %180 = vmatpush1.msra.mxu0 0.0
    %181 = vmatprep.subr.mxu0 0.0
    %182 = vmatpush1.msra.mxu0 0.0
    %183 = vmatprep.subr.mxu0 0.0
    %184 = vmatpush1.msra.mxu0 0.0
    %185 = vmatprep.subr.mxu0 0.0
    %186 = vmatpush1.msra.mxu0 0.0
    %187 = vmatprep.subr.mxu0 0.0
    %188 = vmatpush1.msra.mxu0 0.0
    %189 = vmatprep.subr.mxu0 0.0
    %190 = vmatpush1.msra.mxu0 0.0
    %191 = vmatprep.subr.mxu0 0.0
    %192 = vmatpush1.msra.mxu0 0.0
    %193 = vmatprep.subr.mxu0 0.0
    %194 = vmatpush1.msra.mxu0 0.0
    %195 = vmatprep.subr.mxu0 0.0
    %196 = vmatpush1.msra.mxu0 %v153
    %197 = vmatprep.subr.mxu0 0.0
    %198 = vmatpush1.msra.mxu0 %v152
    %199 = vmatprep.subr.mxu0 0.0
    %200 = vmatpush1.msra.mxu0 %v151
    %201 = vmatprep.subr.mxu0 0.0
    %202 = vmatpush1.msra.mxu0 %v150
    %203 = vmatprep.subr.mxu0 0.0
    %204 = vmatpush2.msra.mxu0 0.0
    %205 = vmatprep.subr.mxu0 0.0
    %206 = vmatpush2.msra.mxu0 0.0
    %207 = vmatprep.subr.mxu0 0.0
    %208 = vmatpush2.msra.mxu0 0.0
    %209 = vmatprep.subr.mxu0 0.0
    %210 = vmatpush2.msra.mxu0 0.0
    %211 = vmatprep.subr.mxu0 0.0
    %212 = vmatpush2.msra.mxu0 0.0
    %213 = vmatprep.subr.mxu0 0.0
    %214 = vmatpush2.msra.mxu0 0.0
    %215 = vmatprep.subr.mxu0 0.0
    %216 = vmatpush2.msra.mxu0 0.0
    %217 = vmatprep.subr.mxu0 0.0
    %218 = vmatpush2.msra.mxu0 0.0
    %219 = vmatprep.subr.mxu0 0.0
    %220 = vmatpush2.msra.mxu0 0.0
    %221 = vmatprep.subr.mxu0 0.0
    %222 = vmatpush2.msra.mxu0 0.0
    %223 = vmatprep.subr.mxu0 0.0
    %224 = vmatpush2.msra.mxu0 0.0
    %225 = vmatprep.subr.mxu0 0.0
    %226 = vmatpush2.msra.mxu0 0.0
    %227 = vmatprep.subr.mxu0 0.0
    %228 = vmatpush2.msra.mxu0 0.0
    %229 = vmatprep.subr.mxu0 0.0
    %230 = vmatpush2.msra.mxu0 0.0
    %231 = vmatprep.subr.mxu0 0.0
    %232 = vmatpush2.msra.mxu0 0.0
    %233 = vmatprep.subr.mxu0 0.0
    %234 = vmatpush2.msra.mxu0 0.0
    %235 = vmatprep.mubr.f32.mxu0 0.0
    %236 = vmatmul.mubr.f32.gmra.mxu0 %v166
    %v237 = vpop.f32.mrf.mxu0
    %v238 = vadd.f32 0.0, %v237
    %v239 = vpop.f32.mrf.mxu0
    %240 = vmatprep.mubr.f32.mxu0 0.0
    %241 = vmatmul.mubr.f32.gmra.mxu0 %v169
    %v242 = vpop.f32.mrf.mxu0
    %v243 = vadd.f32 0.0, %v242
    %v244 = vpop.f32.mrf.mxu0
    %245 = vdwg.mxu0
    %246 = vrot.lane.b32.xlu0 %v142, 88
    %v247 = vpop.permute.xlu0 %246
    %248 = vrot.lane.b32.xlu0 %v147, 88
    %v249 = vpop.permute.xlu0 %248
    %252 = vrot.lane.b32.xlu0 %v142, 120
    %v253 = vpop.permute.xlu0 %252
    %254 = vrot.lane.b32.xlu0 %v147, 120
    %v255 = vpop.permute.xlu0 %254
    %vm258 = vcmask 195584
    %v259 = vsel %vm258, %v247, %v253
    %v260 = vsel %vm258, %v249, %v255
    %261 = vrot.lane.b32.xlu0 %v142, 56
    %v262 = vpop.permute.xlu0 %261
    %263 = vrot.lane.b32.xlu0 %v147, 56
    %v264 = vpop.permute.xlu0 %263
    %v267 = vsel %vm258, %v262, %v247
    %v268 = vsel %vm258, %v264, %v249
    %v269 = vmul.f32 %v142, %v259
    %v270 = vmul.f32 %v147, %v260
    %v272 = vsel %vm68, %v269, 0
    %v275 = vsel %vm68, %v270, 0
    %277 = vmatprep.subr.mxu0 0.0
    %278 = vmatpush1.msra.mxu0 0.0
    %279 = vmatprep.subr.mxu0 0.0
    %280 = vmatpush1.msra.mxu0 0.0
    %281 = vmatprep.subr.mxu0 0.0
    %282 = vmatpush1.msra.mxu0 0.0
    %283 = vmatprep.subr.mxu0 0.0
    %284 = vmatpush1.msra.mxu0 0.0
    %285 = vmatprep.subr.mxu0 0.0
    %286 = vmatpush1.msra.mxu0 0.0
    %287 = vmatprep.subr.mxu0 0.0
    %288 = vmatpush1.msra.mxu0 0.0
    %289 = vmatprep.subr.mxu0 0.0
    %290 = vmatpush1.msra.mxu0 0.0
    %291 = vmatprep.subr.mxu0 0.0
    %292 = vmatpush1.msra.mxu0 0.0
    %293 = vmatprep.subr.mxu0 0.0
    %294 = vmatpush1.msra.mxu0 0.0
    %295 = vmatprep.subr.mxu0 0.0
    %296 = vmatpush1.msra.mxu0 0.0
    %297 = vmatprep.subr.mxu0 0.0
    %298 = vmatpush1.msra.mxu0 0.0
    %299 = vmatprep.subr.mxu0 0.0
    %300 = vmatpush1.msra.mxu0 0.0
    %301 = vmatprep.subr.mxu0 0.0
    %302 = vmatpush1.msra.mxu0 %v153
    %303 = vmatprep.subr.mxu0 0.0
    %304 = vmatpush1.msra.mxu0 %v152
    %305 = vmatprep.subr.mxu0 0.0
    %306 = vmatpush1.msra.mxu0 %v151
    %307 = vmatprep.subr.mxu0 0.0
    %308 = vmatpush1.msra.mxu0 %v150
    %309 = vmatprep.subr.mxu0 0.0
    %310 = vmatpush2.msra.mxu0 0.0
    %311 = vmatprep.subr.mxu0 0.0
    %312 = vmatpush2.msra.mxu0 0.0
    %313 = vmatprep.subr.mxu0 0.0
    %314 = vmatpush2.msra.mxu0 0.0
    %315 = vmatprep.subr.mxu0 0.0
    %316 = vmatpush2.msra.mxu0 0.0
    %317 = vmatprep.subr.mxu0 0.0
    %318 = vmatpush2.msra.mxu0 0.0
    %319 = vmatprep.subr.mxu0 0.0
    %320 = vmatpush2.msra.mxu0 0.0
    %321 = vmatprep.subr.mxu0 0.0
    %322 = vmatpush2.msra.mxu0 0.0
    %323 = vmatprep.subr.mxu0 0.0
    %324 = vmatpush2.msra.mxu0 0.0
    %325 = vmatprep.subr.mxu0 0.0
    %326 = vmatpush2.msra.mxu0 0.0
    %327 = vmatprep.subr.mxu0 0.0
    %328 = vmatpush2.msra.mxu0 0.0
    %329 = vmatprep.subr.mxu0 0.0
    %330 = vmatpush2.msra.mxu0 0.0
    %331 = vmatprep.subr.mxu0 0.0
    %332 = vmatpush2.msra.mxu0 0.0
    %333 = vmatprep.subr.mxu0 0.0
    %334 = vmatpush2.msra.mxu0 0.0
    %335 = vmatprep.subr.mxu0 0.0
    %336 = vmatpush2.msra.mxu0 0.0
    %337 = vmatprep.subr.mxu0 0.0
    %338 = vmatpush2.msra.mxu0 0.0
    %339 = vmatprep.subr.mxu0 0.0
    %340 = vmatpush2.msra.mxu0 0.0
    %341 = vmatprep.mubr.f32.mxu0 0.0
    %342 = vmatmul.mubr.f32.gmra.mxu0 %v272
    %v343 = vpop.f32.mrf.mxu0
    %v344 = vadd.f32 0.0, %v343
    %v345 = vpop.f32.mrf.mxu0
    %346 = vmatprep.mubr.f32.mxu0 0.0
    %347 = vmatmul.mubr.f32.gmra.mxu0 %v275
    %v348 = vpop.f32.mrf.mxu0
    %v349 = vadd.f32 0.0, %v348
    %v350 = vpop.f32.mrf.mxu0
    %351 = vdwg.mxu0
    %352 = vrot.lane.b32.xlu0 %v142, 80
    %v353 = vpop.permute.xlu0 %352
    %354 = vrot.lane.b32.xlu0 %v147, 80
    %v355 = vpop.permute.xlu0 %354
    %358 = vrot.lane.b32.xlu0 %v142, 112
    %v359 = vpop.permute.xlu0 %358
    %360 = vrot.lane.b32.xlu0 %v147, 112
    %v361 = vpop.permute.xlu0 %360
    %vm364 = vcmask 130048
    %v365 = vsel %vm364, %v353, %v359
    %v366 = vsel %vm364, %v355, %v361
    %367 = vrot.lane.b32.xlu0 %v142, 48
    %v368 = vpop.permute.xlu0 %367
    %369 = vrot.lane.b32.xlu0 %v147, 48
    %v370 = vpop.permute.xlu0 %369
    %v373 = vsel %vm364, %v368, %v353
    %v374 = vsel %vm364, %v370, %v355
    %v375 = vmul.f32 %v142, %v365
    %v376 = vmul.f32 %v147, %v366
    %v378 = vsel %vm68, %v375, 0
    %v381 = vsel %vm68, %v376, 0
    %383 = vmatprep.subr.mxu0 0.0
    %384 = vmatpush1.msra.mxu0 0.0
    %385 = vmatprep.subr.mxu0 0.0
    %386 = vmatpush1.msra.mxu0 0.0
    %387 = vmatprep.subr.mxu0 0.0
    %388 = vmatpush1.msra.mxu0 0.0
    %389 = vmatprep.subr.mxu0 0.0
    %390 = vmatpush1.msra.mxu0 0.0
    %391 = vmatprep.subr.mxu0 0.0
    %392 = vmatpush1.msra.mxu0 0.0
    %393 = vmatprep.subr.mxu0 0.0
    %394 = vmatpush1.msra.mxu0 0.0
    %395 = vmatprep.subr.mxu0 0.0
    %396 = vmatpush1.msra.mxu0 0.0
    %397 = vmatprep.subr.mxu0 0.0
    %398 = vmatpush1.msra.mxu0 0.0
    %399 = vmatprep.subr.mxu0 0.0
    %400 = vmatpush1.msra.mxu0 0.0
    %401 = vmatprep.subr.mxu0 0.0
    %402 = vmatpush1.msra.mxu0 0.0
    %403 = vmatprep.subr.mxu0 0.0
    %404 = vmatpush1.msra.mxu0 0.0
    %405 = vmatprep.subr.mxu0 0.0
    %406 = vmatpush1.msra.mxu0 0.0
    %407 = vmatprep.subr.mxu0 0.0
    %408 = vmatpush1.msra.mxu0 %v153
    %409 = vmatprep.subr.mxu0 0.0
    %410 = vmatpush1.msra.mxu0 %v152
    %411 = vmatprep.subr.mxu0 0.0
    %412 = vmatpush1.msra.mxu0 %v151
    %413 = vmatprep.subr.mxu0 0.0
    %414 = vmatpush1.msra.mxu0 %v150
    %415 = vmatprep.subr.mxu0 0.0
    %416 = vmatpush2.msra.mxu0 0.0
    %417 = vmatprep.subr.mxu0 0.0
    %418 = vmatpush2.msra.mxu0 0.0
    %419 = vmatprep.subr.mxu0 0.0
    %420 = vmatpush2.msra.mxu0 0.0
    %421 = vmatprep.subr.mxu0 0.0
    %422 = vmatpush2.msra.mxu0 0.0
    %423 = vmatprep.subr.mxu0 0.0
    %424 = vmatpush2.msra.mxu0 0.0
    %425 = vmatprep.subr.mxu0 0.0
    %426 = vmatpush2.msra.mxu0 0.0
    %427 = vmatprep.subr.mxu0 0.0
    %428 = vmatpush2.msra.mxu0 0.0
    %429 = vmatprep.subr.mxu0 0.0
    %430 = vmatpush2.msra.mxu0 0.0
    %431 = vmatprep.subr.mxu0 0.0
    %432 = vmatpush2.msra.mxu0 0.0
    %433 = vmatprep.subr.mxu0 0.0
    %434 = vmatpush2.msra.mxu0 0.0
    %435 = vmatprep.subr.mxu0 0.0
    %436 = vmatpush2.msra.mxu0 0.0
    %437 = vmatprep.subr.mxu0 0.0
    %438 = vmatpush2.msra.mxu0 0.0
    %439 = vmatprep.subr.mxu0 0.0
    %440 = vmatpush2.msra.mxu0 0.0
    %441 = vmatprep.subr.mxu0 0.0
    %442 = vmatpush2.msra.mxu0 0.0
    %443 = vmatprep.subr.mxu0 0.0
    %444 = vmatpush2.msra.mxu0 0.0
    %445 = vmatprep.subr.mxu0 0.0
    %446 = vmatpush2.msra.mxu0 0.0
    %447 = vmatprep.mubr.f32.mxu0 0.0
    %448 = vmatmul.mubr.f32.gmra.mxu0 %v378
    %v449 = vpop.f32.mrf.mxu0
    %v450 = vadd.f32 0.0, %v449
    %v451 = vpop.f32.mrf.mxu0
    %452 = vmatprep.mubr.f32.mxu0 0.0
    %453 = vmatmul.mubr.f32.gmra.mxu0 %v381
    %v454 = vpop.f32.mrf.mxu0
    %v455 = vadd.f32 0.0, %v454
    %v456 = vpop.f32.mrf.mxu0
    %457 = vdwg.mxu0
    %458 = vrot.lane.b32.xlu0 %v142, 72
    %v459 = vpop.permute.xlu0 %458
    %460 = vrot.lane.b32.xlu0 %v147, 72
    %v461 = vpop.permute.xlu0 %460
    %464 = vrot.lane.b32.xlu0 %v142, 104
    %v465 = vpop.permute.xlu0 %464
    %466 = vrot.lane.b32.xlu0 %v147, 104
    %v467 = vpop.permute.xlu0 %466
    %vm470 = vcmask 64512
    %v471 = vsel %vm470, %v459, %v465
    %v472 = vsel %vm470, %v461, %v467
    %473 = vrot.lane.b32.xlu0 %v142, 40
    %v474 = vpop.permute.xlu0 %473
    %475 = vrot.lane.b32.xlu0 %v147, 40
    %v476 = vpop.permute.xlu0 %475
    %v479 = vsel %vm470, %v474, %v459
    %v480 = vsel %vm470, %v476, %v461
    %v481 = vmul.f32 %v142, %v471
    %v482 = vmul.f32 %v147, %v472
    %v484 = vsel %vm68, %v481, 0
    %v487 = vsel %vm68, %v482, 0
    %489 = vmatprep.subr.mxu0 0.0
    %490 = vmatpush1.msra.mxu0 0.0
    %491 = vmatprep.subr.mxu0 0.0
    %492 = vmatpush1.msra.mxu0 0.0
    %493 = vmatprep.subr.mxu0 0.0
    %494 = vmatpush1.msra.mxu0 0.0
    %495 = vmatprep.subr.mxu0 0.0
    %496 = vmatpush1.msra.mxu0 0.0
    %497 = vmatprep.subr.mxu0 0.0
    %498 = vmatpush1.msra.mxu0 0.0
    %499 = vmatprep.subr.mxu0 0.0
    %500 = vmatpush1.msra.mxu0 0.0
    %501 = vmatprep.subr.mxu0 0.0
    %502 = vmatpush1.msra.mxu0 0.0
    %503 = vmatprep.subr.mxu0 0.0
    %504 = vmatpush1.msra.mxu0 0.0
    %505 = vmatprep.subr.mxu0 0.0
    %506 = vmatpush1.msra.mxu0 0.0
    %507 = vmatprep.subr.mxu0 0.0
    %508 = vmatpush1.msra.mxu0 0.0
    %509 = vmatprep.subr.mxu0 0.0
    %510 = vmatpush1.msra.mxu0 0.0
    %511 = vmatprep.subr.mxu0 0.0
    %512 = vmatpush1.msra.mxu0 0.0
    %513 = vmatprep.subr.mxu0 0.0
    %514 = vmatpush1.msra.mxu0 %v153
    %515 = vmatprep.subr.mxu0 0.0
    %516 = vmatpush1.msra.mxu0 %v152
    %517 = vmatprep.subr.mxu0 0.0
    %518 = vmatpush1.msra.mxu0 %v151
    %519 = vmatprep.subr.mxu0 0.0
    %520 = vmatpush1.msra.mxu0 %v150
    %521 = vmatprep.subr.mxu0 0.0
    %522 = vmatpush2.msra.mxu0 0.0
    %523 = vmatprep.subr.mxu0 0.0
    %524 = vmatpush2.msra.mxu0 0.0
    %525 = vmatprep.subr.mxu0 0.0
    %526 = vmatpush2.msra.mxu0 0.0
    %527 = vmatprep.subr.mxu0 0.0
    %528 = vmatpush2.msra.mxu0 0.0
    %529 = vmatprep.subr.mxu0 0.0
    %530 = vmatpush2.msra.mxu0 0.0
    %531 = vmatprep.subr.mxu0 0.0
    %532 = vmatpush2.msra.mxu0 0.0
    %533 = vmatprep.subr.mxu0 0.0
    %534 = vmatpush2.msra.mxu0 0.0
    %535 = vmatprep.subr.mxu0 0.0
    %536 = vmatpush2.msra.mxu0 0.0
    %537 = vmatprep.subr.mxu0 0.0
    %538 = vmatpush2.msra.mxu0 0.0
    %539 = vmatprep.subr.mxu0 0.0
    %540 = vmatpush2.msra.mxu0 0.0
    %541 = vmatprep.subr.mxu0 0.0
    %542 = vmatpush2.msra.mxu0 0.0
    %543 = vmatprep.subr.mxu0 0.0
    %544 = vmatpush2.msra.mxu0 0.0
    %545 = vmatprep.subr.mxu0 0.0
    %546 = vmatpush2.msra.mxu0 0.0
    %547 = vmatprep.subr.mxu0 0.0
    %548 = vmatpush2.msra.mxu0 0.0
    %549 = vmatprep.subr.mxu0 0.0
    %550 = vmatpush2.msra.mxu0 0.0
    %551 = vmatprep.subr.mxu0 0.0
    %552 = vmatpush2.msra.mxu0 0.0
    %553 = vmatprep.mubr.f32.mxu0 0.0
    %554 = vmatmul.mubr.f32.gmra.mxu0 %v484
    %v555 = vpop.f32.mrf.mxu0
    %v556 = vadd.f32 0.0, %v555
    %v557 = vpop.f32.mrf.mxu0
    %558 = vmatprep.mubr.f32.mxu0 0.0
    %559 = vmatmul.mubr.f32.gmra.mxu0 %v487
    %v560 = vpop.f32.mrf.mxu0
    %v561 = vadd.f32 0.0, %v560
    %v562 = vpop.f32.mrf.mxu0
    %563 = vdwg.mxu0
    %v564 = vmax.f32 %v238, %v344
    %v565 = vmax.f32 %v243, %v349
    %v566 = vmax.f32 %v564, %v450
    %v567 = vmax.f32 %v565, %v455
    %v568 = vmax.f32 %v566, %v556
    %v569 = vmax.f32 %v567, %v561
    %v570 = vsub.f32 %v238, %v568
    %v571 = vsub.f32 %v243, %v569
    %v572 = vmul.f32 %v570, 1.442695
    %v573 = vpow.pop %v572
    %v574 = vmul.f32 %v571, 1.442695
    %v575 = vpow.pop %v574
    %v577 = vsel %vm470, %v573, 0
    %v580 = vsel %vm470, %v575, 0
    %582 = vmatprep.subr.mxu0 0.0
    %583 = vmatpush1.msra.mxu0 0.0
    %584 = vmatprep.subr.mxu0 0.0
    %585 = vmatpush1.msra.mxu0 0.0
    %586 = vmatprep.subr.mxu0 0.0
    %587 = vmatpush1.msra.mxu0 0.0
    %588 = vmatprep.subr.mxu0 0.0
    %589 = vmatpush1.msra.mxu0 0.0
    %590 = vmatprep.subr.mxu0 0.0
    %591 = vmatpush1.msra.mxu0 0.0
    %592 = vmatprep.subr.mxu0 0.0
    %593 = vmatpush1.msra.mxu0 0.0
    %594 = vmatprep.subr.mxu0 0.0
    %595 = vmatpush1.msra.mxu0 0.0
    %596 = vmatprep.subr.mxu0 0.0
    %597 = vmatpush1.msra.mxu0 0.0
    %598 = vmatprep.subr.mxu0 0.0
    %599 = vmatpush1.msra.mxu0 0.0
    %600 = vmatprep.subr.mxu0 0.0
    %601 = vmatpush1.msra.mxu0 0.0
    %602 = vmatprep.subr.mxu0 0.0
    %603 = vmatpush1.msra.mxu0 0.0
    %604 = vmatprep.subr.mxu0 0.0
    %605 = vmatpush1.msra.mxu0 0.0
    %606 = vmatprep.subr.mxu0 0.0
    %607 = vmatpush1.msra.mxu0 0.0
    %608 = vmatprep.subr.mxu0 0.0
    %609 = vmatpush1.msra.mxu0 0.0
    %610 = vmatprep.subr.mxu0 0.0
    %611 = vmatpush1.msra.mxu0 0.0
    %612 = vmatprep.subr.mxu0 0.0
    %613 = vmatpush1.msra.mxu0 %v154
    %614 = vmatprep.subr.mxu0 0.0
    %615 = vmatpush2.msra.mxu0 0.0
    %616 = vmatprep.subr.mxu0 0.0
    %617 = vmatpush2.msra.mxu0 0.0
    %618 = vmatprep.subr.mxu0 0.0
    %619 = vmatpush2.msra.mxu0 0.0
    %620 = vmatprep.subr.mxu0 0.0
    %621 = vmatpush2.msra.mxu0 0.0
    %622 = vmatprep.subr.mxu0 0.0
    %623 = vmatpush2.msra.mxu0 0.0
    %624 = vmatprep.subr.mxu0 0.0
    %625 = vmatpush2.msra.mxu0 0.0
    %626 = vmatprep.subr.mxu0 0.0
    %627 = vmatpush2.msra.mxu0 0.0
    %628 = vmatprep.subr.mxu0 0.0
    %629 = vmatpush2.msra.mxu0 0.0
    %630 = vmatprep.subr.mxu0 0.0
    %631 = vmatpush2.msra.mxu0 0.0
    %632 = vmatprep.subr.mxu0 0.0
    %633 = vmatpush2.msra.mxu0 0.0
    %634 = vmatprep.subr.mxu0 0.0
    %635 = vmatpush2.msra.mxu0 0.0
    %636 = vmatprep.subr.mxu0 0.0
    %637 = vmatpush2.msra.mxu0 0.0
    %638 = vmatprep.subr.mxu0 0.0
    %639 = vmatpush2.msra.mxu0 0.0
    %640 = vmatprep.subr.mxu0 0.0
    %641 = vmatpush2.msra.mxu0 0.0
    %642 = vmatprep.subr.mxu0 0.0
    %643 = vmatpush2.msra.mxu0 0.0
    %644 = vmatprep.subr.mxu0 0.0
    %645 = vmatpush2.msra.mxu0 0.0
    %646 = vmatprep.mubr.f32.mxu0 0.0
    %647 = vmatmul.mubr.f32.gmra.mxu0 %v577
    %v648 = vpop.f32.mrf.mxu0
    %v649 = vadd.f32 0.0, %v648
    %v650 = vpop.f32.mrf.mxu0
    %651 = vmatprep.mubr.f32.mxu0 0.0
    %652 = vmatmul.mubr.f32.gmra.mxu0 %v580
    %v653 = vpop.f32.mrf.mxu0
    %v654 = vadd.f32 0.0, %v653
    %v655 = vpop.f32.mrf.mxu0
    %656 = vdwg.mxu0
    %657 = vrot.lane.b32.xlu0 %v142, 64
    %v658 = vpop.permute.xlu0 %657
    %659 = vrot.lane.b32.xlu0 %v147, 64
    %v660 = vpop.permute.xlu0 %659
    %v663 = vmul.f32 %v649, %v658
    %v664 = vmul.f32 %v654, %v660
    %v665 = vsub.f32 %v344, %v568
    %v666 = vsub.f32 %v349, %v569
    %v667 = vmul.f32 %v665, 1.442695
    %v668 = vpow.pop %v667
    %v669 = vmul.f32 %v666, 1.442695
    %v670 = vpow.pop %v669
    %v672 = vsel %vm470, %v668, 0
    %v675 = vsel %vm470, %v670, 0
    %677 = vmatprep.subr.mxu0 0.0
    %678 = vmatpush1.msra.mxu0 0.0
    %679 = vmatprep.subr.mxu0 0.0
    %680 = vmatpush1.msra.mxu0 0.0
    %681 = vmatprep.subr.mxu0 0.0
    %682 = vmatpush1.msra.mxu0 0.0
    %683 = vmatprep.subr.mxu0 0.0
    %684 = vmatpush1.msra.mxu0 0.0
    %685 = vmatprep.subr.mxu0 0.0
    %686 = vmatpush1.msra.mxu0 0.0
    %687 = vmatprep.subr.mxu0 0.0
    %688 = vmatpush1.msra.mxu0 0.0
    %689 = vmatprep.subr.mxu0 0.0
    %690 = vmatpush1.msra.mxu0 0.0
    %691 = vmatprep.subr.mxu0 0.0
    %692 = vmatpush1.msra.mxu0 0.0
    %693 = vmatprep.subr.mxu0 0.0
    %694 = vmatpush1.msra.mxu0 0.0
    %695 = vmatprep.subr.mxu0 0.0
    %696 = vmatpush1.msra.mxu0 0.0
    %697 = vmatprep.subr.mxu0 0.0
    %698 = vmatpush1.msra.mxu0 0.0
    %699 = vmatprep.subr.mxu0 0.0
    %700 = vmatpush1.msra.mxu0 0.0
    %701 = vmatprep.subr.mxu0 0.0
    %702 = vmatpush1.msra.mxu0 0.0
    %703 = vmatprep.subr.mxu0 0.0
    %704 = vmatpush1.msra.mxu0 0.0
    %705 = vmatprep.subr.mxu0 0.0
    %706 = vmatpush1.msra.mxu0 0.0
    %707 = vmatprep.subr.mxu0 0.0
    %708 = vmatpush1.msra.mxu0 %v154
    %709 = vmatprep.subr.mxu0 0.0
    %710 = vmatpush2.msra.mxu0 0.0
    %711 = vmatprep.subr.mxu0 0.0
    %712 = vmatpush2.msra.mxu0 0.0
    %713 = vmatprep.subr.mxu0 0.0
    %714 = vmatpush2.msra.mxu0 0.0
    %715 = vmatprep.subr.mxu0 0.0
    %716 = vmatpush2.msra.mxu0 0.0
    %717 = vmatprep.subr.mxu0 0.0
    %718 = vmatpush2.msra.mxu0 0.0
    %719 = vmatprep.subr.mxu0 0.0
    %720 = vmatpush2.msra.mxu0 0.0
    %721 = vmatprep.subr.mxu0 0.0
    %722 = vmatpush2.msra.mxu0 0.0
    %723 = vmatprep.subr.mxu0 0.0
    %724 = vmatpush2.msra.mxu0 0.0
    %725 = vmatprep.subr.mxu0 0.0
    %726 = vmatpush2.msra.mxu0 0.0
    %727 = vmatprep.subr.mxu0 0.0
    %728 = vmatpush2.msra.mxu0 0.0
    %729 = vmatprep.subr.mxu0 0.0
    %730 = vmatpush2.msra.mxu0 0.0
    %731 = vmatprep.subr.mxu0 0.0
    %732 = vmatpush2.msra.mxu0 0.0
    %733 = vmatprep.subr.mxu0 0.0
    %734 = vmatpush2.msra.mxu0 0.0
    %735 = vmatprep.subr.mxu0 0.0
    %736 = vmatpush2.msra.mxu0 0.0
    %737 = vmatprep.subr.mxu0 0.0
    %738 = vmatpush2.msra.mxu0 0.0
    %739 = vmatprep.subr.mxu0 0.0
    %740 = vmatpush2.msra.mxu0 0.0
    %741 = vmatprep.mubr.f32.mxu0 0.0
    %742 = vmatmul.mubr.f32.gmra.mxu0 %v672
    %v743 = vpop.f32.mrf.mxu0
    %v744 = vadd.f32 0.0, %v743
    %v745 = vpop.f32.mrf.mxu0
    %746 = vmatprep.mubr.f32.mxu0 0.0
    %747 = vmatmul.mubr.f32.gmra.mxu0 %v675
    %v748 = vpop.f32.mrf.mxu0
    %v749 = vadd.f32 0.0, %v748
    %v750 = vpop.f32.mrf.mxu0
    %751 = vdwg.mxu0
    %v752 = vmul.f32 %v744, %v267
    %v753 = vmul.f32 %v749, %v268
    %v754 = vadd.f32 %v663, %v752
    %v755 = vadd.f32 %v664, %v753
    %v756 = vadd.f32 %v649, %v744
    %v757 = vadd.f32 %v654, %v749
    %v758 = vsub.f32 %v450, %v568
    %v759 = vsub.f32 %v455, %v569
    %v760 = vmul.f32 %v758, 1.442695
    %v761 = vpow.pop %v760
    %v762 = vmul.f32 %v759, 1.442695
    %v763 = vpow.pop %v762
    %v765 = vsel %vm470, %v761, 0
    %v768 = vsel %vm470, %v763, 0
    %770 = vmatprep.subr.mxu0 0.0
    %771 = vmatpush1.msra.mxu0 0.0
    %772 = vmatprep.subr.mxu0 0.0
    %773 = vmatpush1.msra.mxu0 0.0
    %774 = vmatprep.subr.mxu0 0.0
    %775 = vmatpush1.msra.mxu0 0.0
    %776 = vmatprep.subr.mxu0 0.0
    %777 = vmatpush1.msra.mxu0 0.0
    %778 = vmatprep.subr.mxu0 0.0
    %779 = vmatpush1.msra.mxu0 0.0
    %780 = vmatprep.subr.mxu0 0.0
    %781 = vmatpush1.msra.mxu0 0.0
    %782 = vmatprep.subr.mxu0 0.0
    %783 = vmatpush1.msra.mxu0 0.0
    %784 = vmatprep.subr.mxu0 0.0
    %785 = vmatpush1.msra.mxu0 0.0
    %786 = vmatprep.subr.mxu0 0.0
    %787 = vmatpush1.msra.mxu0 0.0
    %788 = vmatprep.subr.mxu0 0.0
    %789 = vmatpush1.msra.mxu0 0.0
    %790 = vmatprep.subr.mxu0 0.0
    %791 = vmatpush1.msra.mxu0 0.0
    %792 = vmatprep.subr.mxu0 0.0
    %793 = vmatpush1.msra.mxu0 0.0
    %794 = vmatprep.subr.mxu0 0.0
    %795 = vmatpush1.msra.mxu0 0.0
    %796 = vmatprep.subr.mxu0 0.0
    %797 = vmatpush1.msra.mxu0 0.0
    %798 = vmatprep.subr.mxu0 0.0
    %799 = vmatpush1.msra.mxu0 0.0
    %800 = vmatprep.subr.mxu0 0.0
    %801 = vmatpush1.msra.mxu0 %v154
    %802 = vmatprep.subr.mxu0 0.0
    %803 = vmatpush2.msra.mxu0 0.0
    %804 = vmatprep.subr.mxu0 0.0
    %805 = vmatpush2.msra.mxu0 0.0
    %806 = vmatprep.subr.mxu0 0.0
    %807 = vmatpush2.msra.mxu0 0.0
    %808 = vmatprep.subr.mxu0 0.0
    %809 = vmatpush2.msra.mxu0 0.0
    %810 = vmatprep.subr.mxu0 0.0
    %811 = vmatpush2.msra.mxu0 0.0
    %812 = vmatprep.subr.mxu0 0.0
    %813 = vmatpush2.msra.mxu0 0.0
    %814 = vmatprep.subr.mxu0 0.0
    %815 = vmatpush2.msra.mxu0 0.0
    %816 = vmatprep.subr.mxu0 0.0
    %817 = vmatpush2.msra.mxu0 0.0
    %818 = vmatprep.subr.mxu0 0.0
    %819 = vmatpush2.msra.mxu0 0.0
    %820 = vmatprep.subr.mxu0 0.0
    %821 = vmatpush2.msra.mxu0 0.0
    %822 = vmatprep.subr.mxu0 0.0
    %823 = vmatpush2.msra.mxu0 0.0
    %824 = vmatprep.subr.mxu0 0.0
    %825 = vmatpush2.msra.mxu0 0.0
    %826 = vmatprep.subr.mxu0 0.0
    %827 = vmatpush2.msra.mxu0 0.0
    %828 = vmatprep.subr.mxu0 0.0
    %829 = vmatpush2.msra.mxu0 0.0
    %830 = vmatprep.subr.mxu0 0.0
    %831 = vmatpush2.msra.mxu0 0.0
    %832 = vmatprep.subr.mxu0 0.0
    %833 = vmatpush2.msra.mxu0 0.0
    %834 = vmatprep.mubr.f32.mxu0 0.0
    %835 = vmatmul.mubr.f32.gmra.mxu0 %v765
    %v836 = vpop.f32.mrf.mxu0
    %v837 = vadd.f32 0.0, %v836
    %v838 = vpop.f32.mrf.mxu0
    %839 = vmatprep.mubr.f32.mxu0 0.0
    %840 = vmatmul.mubr.f32.gmra.mxu0 %v768
    %v841 = vpop.f32.mrf.mxu0
    %v842 = vadd.f32 0.0, %v841
    %v843 = vpop.f32.mrf.mxu0
    %844 = vdwg.mxu0
    %v845 = vmul.f32 %v837, %v373
    %v846 = vmul.f32 %v842, %v374
    %v847 = vadd.f32 %v754, %v845
    %v848 = vadd.f32 %v755, %v846
    %v849 = vadd.f32 %v756, %v837
    %v850 = vadd.f32 %v757, %v842
    %v851 = vsub.f32 %v556, %v568
    %v852 = vsub.f32 %v561, %v569
    %v853 = vmul.f32 %v851, 1.442695
    %v854 = vpow.pop %v853
    %v855 = vmul.f32 %v852, 1.442695
    %v856 = vpow.pop %v855
    %v858 = vsel %vm470, %v854, 0
    %v861 = vsel %vm470, %v856, 0
    %863 = vmatprep.subr.mxu0 0.0
    %864 = vmatpush1.msra.mxu0 0.0
    %865 = vmatprep.subr.mxu0 0.0
    %866 = vmatpush1.msra.mxu0 0.0
    %867 = vmatprep.subr.mxu0 0.0
    %868 = vmatpush1.msra.mxu0 0.0
    %869 = vmatprep.subr.mxu0 0.0
    %870 = vmatpush1.msra.mxu0 0.0
    %871 = vmatprep.subr.mxu0 0.0
    %872 = vmatpush1.msra.mxu0 0.0
    %873 = vmatprep.subr.mxu0 0.0
    %874 = vmatpush1.msra.mxu0 0.0
    %875 = vmatprep.subr.mxu0 0.0
    %876 = vmatpush1.msra.mxu0 0.0
    %877 = vmatprep.subr.mxu0 0.0
    %878 = vmatpush1.msra.mxu0 0.0
    %879 = vmatprep.subr.mxu0 0.0
    %880 = vmatpush1.msra.mxu0 0.0
    %881 = vmatprep.subr.mxu0 0.0
    %882 = vmatpush1.msra.mxu0 0.0
    %883 = vmatprep.subr.mxu0 0.0
    %884 = vmatpush1.msra.mxu0 0.0
    %885 = vmatprep.subr.mxu0 0.0
    %886 = vmatpush1.msra.mxu0 0.0
    %887 = vmatprep.subr.mxu0 0.0
    %888 = vmatpush1.msra.mxu0 0.0
    %889 = vmatprep.subr.mxu0 0.0
    %890 = vmatpush1.msra.mxu0 0.0
    %891 = vmatprep.subr.mxu0 0.0
    %892 = vmatpush1.msra.mxu0 0.0
    %893 = vmatprep.subr.mxu0 0.0
    %894 = vmatpush1.msra.mxu0 %v154
    %895 = vmatprep.subr.mxu0 0.0
    %896 = vmatpush2.msra.mxu0 0.0
    %897 = vmatprep.subr.mxu0 0.0
    %898 = vmatpush2.msra.mxu0 0.0
    %899 = vmatprep.subr.mxu0 0.0
    %900 = vmatpush2.msra.mxu0 0.0
    %901 = vmatprep.subr.mxu0 0.0
    %902 = vmatpush2.msra.mxu0 0.0
    %903 = vmatprep.subr.mxu0 0.0
    %904 = vmatpush2.msra.mxu0 0.0
    %905 = vmatprep.subr.mxu0 0.0
    %906 = vmatpush2.msra.mxu0 0.0
    %907 = vmatprep.subr.mxu0 0.0
    %908 = vmatpush2.msra.mxu0 0.0
    %909 = vmatprep.subr.mxu0 0.0
    %910 = vmatpush2.msra.mxu0 0.0
    %911 = vmatprep.subr.mxu0 0.0
    %912 = vmatpush2.msra.mxu0 0.0
    %913 = vmatprep.subr.mxu0 0.0
    %914 = vmatpush2.msra.mxu0 0.0
    %915 = vmatprep.subr.mxu0 0.0
    %916 = vmatpush2.msra.mxu0 0.0
    %917 = vmatprep.subr.mxu0 0.0
    %918 = vmatpush2.msra.mxu0 0.0
    %919 = vmatprep.subr.mxu0 0.0
    %920 = vmatpush2.msra.mxu0 0.0
    %921 = vmatprep.subr.mxu0 0.0
    %922 = vmatpush2.msra.mxu0 0.0
    %923 = vmatprep.subr.mxu0 0.0
    %924 = vmatpush2.msra.mxu0 0.0
    %925 = vmatprep.subr.mxu0 0.0
    %926 = vmatpush2.msra.mxu0 0.0
    %927 = vmatprep.mubr.f32.mxu0 0.0
    %928 = vmatmul.mubr.f32.gmra.mxu0 %v858
    %v929 = vpop.f32.mrf.mxu0
    %v930 = vadd.f32 0.0, %v929
    %v931 = vpop.f32.mrf.mxu0
    %932 = vmatprep.mubr.f32.mxu0 0.0
    %933 = vmatmul.mubr.f32.gmra.mxu0 %v861
    %v934 = vpop.f32.mrf.mxu0
    %v935 = vadd.f32 0.0, %v934
    %v936 = vpop.f32.mrf.mxu0
    %937 = vdwg.mxu0
    %v938 = vmul.f32 %v930, %v479
    %v939 = vmul.f32 %v935, %v480
    %v940 = vadd.f32 %v847, %v938
    %v941 = vadd.f32 %v848, %v939
    %v942 = vadd.f32 %v849, %v930
    %v943 = vadd.f32 %v850, %v935
    %v944 = vrcp.pop %v942
    %v945 = vrcp.pop %v943
    %v946 = vmul.f32 %v940, %v944
    %v947 = vmul.f32 %v941, %v945
    %v948 = vld [vmem:[#allocation5] sm:$0xff]
    %v949 = vld [vmem:[#allocation5 + $0x8] sm:$0xff]
    %v950 = vld [vmem:[#allocation5 + $0x10] sm:$0xff]
    %v951 = vld [vmem:[#allocation5 + $0x18] sm:$0xff]
    %v952 = vld [vmem:[%s6] sm:$0x1]
    %v954 = vlaneseq
    %v955 = vshrl.u32 %v954, 7
    %v956 = vsub.s32 0, %v955
    %v957 = vrot.slane %v952, %v956
    %v960 = vsel %vm68, %v946, 0
    %v963 = vsel %vm68, %v947, 0
    %965 = vmatprep.subr.mxu0 0.0
    %966 = vmatpush1.msra.mxu0 0.0
    %967 = vmatprep.subr.mxu0 0.0
    %968 = vmatpush1.msra.mxu0 0.0
    %969 = vmatprep.subr.mxu0 0.0
    %970 = vmatpush1.msra.mxu0 0.0
    %971 = vmatprep.subr.mxu0 0.0
    %972 = vmatpush1.msra.mxu0 0.0
    %973 = vmatprep.subr.mxu0 0.0
    %974 = vmatpush1.msra.mxu0 0.0
    %975 = vmatprep.subr.mxu0 0.0
    %976 = vmatpush1.msra.mxu0 0.0
    %977 = vmatprep.subr.mxu0 0.0
    %978 = vmatpush1.msra.mxu0 0.0
    %979 = vmatprep.subr.mxu0 0.0
    %980 = vmatpush1.msra.mxu0 0.0
    %981 = vmatprep.subr.mxu0 0.0
    %982 = vmatpush1.msra.mxu0 0.0
    %983 = vmatprep.subr.mxu0 0.0
    %984 = vmatpush1.msra.mxu0 0.0
    %985 = vmatprep.subr.mxu0 0.0
    %986 = vmatpush1.msra.mxu0 0.0
    %987 = vmatprep.subr.mxu0 0.0
    %988 = vmatpush1.msra.mxu0 0.0
    %989 = vmatprep.subr.mxu0 0.0
    %990 = vmatpush1.msra.mxu0 %v951
    %991 = vmatprep.subr.mxu0 0.0
    %992 = vmatpush1.msra.mxu0 %v950
    %993 = vmatprep.subr.mxu0 0.0
    %994 = vmatpush1.msra.mxu0 %v949
    %995 = vmatprep.subr.mxu0 0.0
    %996 = vmatpush1.msra.mxu0 %v948
    %997 = vmatprep.subr.mxu0 0.0
    %998 = vmatpush2.msra.mxu0 0.0
    %999 = vmatprep.subr.mxu0 0.0
    %1000 = vmatpush2.msra.mxu0 0.0
    %1001 = vmatprep.subr.mxu0 0.0
    %1002 = vmatpush2.msra.mxu0 0.0
    %1003 = vmatprep.subr.mxu0 0.0
    %1004 = vmatpush2.msra.mxu0 0.0
    %1005 = vmatprep.subr.mxu0 0.0
    %1006 = vmatpush2.msra.mxu0 0.0
    %1007 = vmatprep.subr.mxu0 0.0
    %1008 = vmatpush2.msra.mxu0 0.0
    %1009 = vmatprep.subr.mxu0 0.0
    %1010 = vmatpush2.msra.mxu0 0.0
    %1011 = vmatprep.subr.mxu0 0.0
    %1012 = vmatpush2.msra.mxu0 0.0
    %1013 = vmatprep.subr.mxu0 0.0
    %1014 = vmatpush2.msra.mxu0 0.0
    %1015 = vmatprep.subr.mxu0 0.0
    %1016 = vmatpush2.msra.mxu0 0.0
    %1017 = vmatprep.subr.mxu0 0.0
    %1018 = vmatpush2.msra.mxu0 0.0
    %1019 = vmatprep.subr.mxu0 0.0
    %1020 = vmatpush2.msra.mxu0 0.0
    %1021 = vmatprep.subr.mxu0 0.0
    %1022 = vmatpush2.msra.mxu0 0.0
    %1023 = vmatprep.subr.mxu0 0.0
    %1024 = vmatpush2.msra.mxu0 0.0
    %1025 = vmatprep.subr.mxu0 0.0
    %1026 = vmatpush2.msra.mxu0 0.0
    %1027 = vmatprep.subr.mxu0 0.0
    %1028 = vmatpush2.msra.mxu0 0.0
    %1029 = vmatprep.mubr.f32.mxu0 0.0
    %1030 = vmatmul.mubr.f32.gmra.mxu0 %v960
    %v1031 = vpop.f32.mrf.mxu0
    %v1032 = vadd.f32 %v957, %v1031
    %v1033 = vpop.f32.mrf.mxu0
    %1034 = vmatprep.mubr.f32.mxu0 0.0
    %1035 = vmatmul.mubr.f32.gmra.mxu0 %v963
    %v1036 = vpop.f32.mrf.mxu0
    %v1037 = vadd.f32 %v957, %v1036
    %v1038 = vpop.f32.mrf.mxu0
    %1039 = vdwg.mxu0
    %1040 = vst.msk [vmem:[#allocation7] sm:$0xff] %vm68, %v1032
    %1041 = vst.msk [vmem:[#allocation7 + $0x8] sm:$0xff] %vm68, %v1037
    // Predicated region
    $region38: #{tpu_custom_call.1} parent=1 // pred_check
      _
    $region39: #{tpu_custom_call.1} parent=1 // pred_check_branch
      %1043 = sbr.rel (0) target = $region41
    $region40: #{tpu_custom_call.1} parent=1 // pred_region
      %s1045 = ssub.s32 256, 256
      %1046 = vsyncadd [#allocation4], %s1045
      %s1047 = sshll.u32 [#allocation7], 4
      %s1048 = int_to_ptr.vmem [resolvable:$true] %s1047
      %1053 = dma.vmem_to_hbm [thread:$0]  %s1048, 256, %s7, [#allocation4], 128, 128, 8
    $region41: #{tpu_custom_call.1} parent=1 // pred_fallthru
      _
    // Predicated region
    $region42: #{tpu_custom_call.1} parent=1 // pred_check
      _
    $region43: #{tpu_custom_call.1} parent=1 // pred_check_branch
      %1055 = sbr.rel (0) target = $region45
    $region44: #{tpu_custom_call.1} parent=1 // pred_region
      %1056 = dma.done [#allocation4], 256
    $region45: #{tpu_custom_call.1} parent=1 // pred_fallthru
      _
    %1057 = vsyncpa [#allocation3], 1
    %1058 = vsyncpa [#allocation6], 1
    %1059 = vsyncpa [#allocation4], 1

</llo_original>
